<compile_context>
chip_gen: v7x
topology: tpu7x:2x2x1
jax: 0.10.0
libtpu: 0.0.40
codegen_flags: <defaults>
</compile_context>

<pallas_src>
import numpy as np
import jax
import jax.numpy as jnp
from jax.experimental import pallas as pl
from jax.experimental.pallas import tpu as pltpu

EPS = 2.0 ** (-8)   # eps used by the PyTorch module's LayerNorms
ROW_TILE = 8        # batch rows per grid step (bump to 512-2048 for big batches)


# ---------------- offline parameter preprocessing (plain numpy) ----------------

def conv_to_matrix(w, in_chw, stride, pad):
    """Dense matrix M (C*H*W, Cout*Hout*Wout) such that conv(x) == x_flat @ M."""
    w = np.asarray(w, dtype=np.float32)
    c_out, c_in, k, _ = w.shape
    C, H, W = in_chw
    H_out = (H + 2 * pad - k) // stride + 1
    W_out = (W + 2 * pad - k) // stride + 1
    M = np.zeros((C * H * W, c_out * H_out * W_out), dtype=np.float32)
    for oc in range(c_out):
        for oh in range(H_out):
            for ow in range(W_out):
                o = oc * H_out * W_out + oh * W_out + ow
                for ic in range(c_in):
                    for kh in range(k):
                        for kw in range(k):
                            ih = oh * stride + kh - pad
                            iw = ow * stride + kw - pad
                            if 0 <= ih < H and 0 <= iw < W:
                                M[ic * H * W + ih * W + iw, o] += w[oc, ic, kh, kw]
    return M


# Packed-slab row layout (all offsets static, sliced with zero-cost ref views):
#   rows  0:18, cols 0:32  -> [W1@M_conv1 | W1@M_shortcut]   (branch matmul)
#   rows 24:40, cols 0:16  -> M_conv2
#   rows 40:56, cols 0:10  -> W_final.T
#   row  56    , cols 0:16 -> b1 @ M_conv1
#   row  57    , cols 0:16 -> b1 @ M_shortcut
#   rows 58..63, cols 0:16 -> g1, be1, g2, be2, gs, bes
#   row  64    , cols 0:10 -> b_final
def pack_params(w1, b1, m1, m2, ms, g1, be1, g2, be2, gs, bes, wf, bf):
    w1 = np.asarray(w1, np.float32)
    b1 = np.asarray(b1, np.float32).reshape(1, -1)
    m1 = np.asarray(m1, np.float32)
    ms = np.asarray(ms, np.float32)

    m_branch = np.concatenate([w1 @ m1, w1 @ ms], axis=1)        # (18, 32)
    b_c1 = (b1 @ m1).reshape(-1)                                 # (16,)
    b_sc = (b1 @ ms).reshape(-1)                                 # (16,)

    slab = np.zeros((72, 128), np.float32)
    slab[0:18, 0:32] = m_branch
    slab[24:40, 0:16] = np.asarray(m2, np.float32)
    slab[40:56, 0:10] = np.asarray(wf, np.float32)
    slab[56, 0:16] = b_c1
    slab[57, 0:16] = b_sc
    slab[58, 0:16] = np.asarray(g1, np.float32).reshape(-1)
    slab[59, 0:16] = np.asarray(be1, np.float32).reshape(-1)
    slab[60, 0:16] = np.asarray(g2, np.float32).reshape(-1)
    slab[61, 0:16] = np.asarray(be2, np.float32).reshape(-1)
    slab[62, 0:16] = np.asarray(gs, np.float32).reshape(-1)
    slab[63, 0:16] = np.asarray(bes, np.float32).reshape(-1)
    slab[64, 0:10] = np.asarray(bf, np.float32).reshape(-1)
    return jnp.asarray(slab)


# ---------------- Pallas kernel: the whole forward pass ----------------

def blk_model_kernel(x_ref, p_ref, o_ref):
    def layernorm(h, gamma, beta):
        # one-pass: var = E[h^2] - mean^2  (one XLU reduction pair, rsqrt on EUP)
        inv_d = 1.0 / h.shape[-1]
        mean = jnp.sum(h, axis=-1, keepdims=True) * inv_d
        ex2 = jnp.sum(h * h, axis=-1, keepdims=True) * inv_d
        var = ex2 - mean * mean
        return (h - mean) * jax.lax.rsqrt(var + EPS) * gamma + beta

    x = x_ref[...]                                      # (ROW_TILE, 18)

    # static slices of the single packed parameter slab (zero-cost views)
    m_branch = p_ref[0:18, 0:32]
    m2 = p_ref[24:40, 0:16]
    wf = p_ref[40:56, 0:10]
    b_c1 = p_ref[56:57, 0:16]
    b_sc = p_ref[57:58, 0:16]
    g1, be1 = p_ref[58:59, 0:16], p_ref[59:60, 0:16]
    g2, be2 = p_ref[60:61, 0:16], p_ref[61:62, 0:16]
    gs, bes = p_ref[62:63, 0:16], p_ref[63:64, 0:16]
    bf = p_ref[64:65, 0:10]

    # fused branch matmul: [conv1(h) | shortcut_conv(h)] with first_layer folded in
    br = jnp.dot(x, m_branch, preferred_element_type=jnp.float32)   # (T, 32)
    c1 = br[:, 0:16] + b_c1
    sc = br[:, 16:32] + b_sc

    # main path: LN -> ReLU -> conv2 -> LN
    a1 = jnp.maximum(layernorm(c1, g1, be1), 0.0)
    c2 = jnp.dot(a1, m2, preferred_element_type=jnp.float32)        # (T, 16)
    n2 = layernorm(c2, g2, be2)

    # shortcut: LN
    ns = layernorm(sc, gs, bes)

    blk = jnp.maximum(n2 + ns, 0.0)                                  # (T, 16)

    # final_layer: Linear(16 -> 10) + bias
    o_ref[...] = jnp.dot(blk, wf, preferred_element_type=jnp.float32) + bf


def blk_model_forward(x, packed):
    n, d_in = x.shape
    n_pad = ((n + ROW_TILE - 1) // ROW_TILE) * ROW_TILE
    if n_pad != n:
        x = jnp.pad(x, ((0, n_pad - n), (0, 0)))
    out = pl.pallas_call(
        blk_model_kernel,
        out_shape=jax.ShapeDtypeStruct((n_pad, 10), jnp.float32),
        grid=(n_pad // ROW_TILE,),
        in_specs=[
            pl.BlockSpec((ROW_TILE, d_in), lambda i: (i, 0)),   # batch row tile
            pl.BlockSpec(packed.shape, lambda i: (0, 0)),       # param slab, resident
        ],
        out_specs=pl.BlockSpec((ROW_TILE, 10), lambda i: (i, 0)),
        compiler_params=pltpu.CompilerParams(
            dimension_semantics=("parallel",)),                 # shards across TCs on v7x
    )(x, packed)
    return out[:n]


# ---------------- pure-JAX reference (unfused math, for correctness check) ----------------

def reference_forward(x, params):
    (w1, b1, m1, g1, be1, m2, g2, be2, ms, gs, bes, wf, bf) = params

    def layernorm(h, gamma, beta):
        mu = jnp.mean(h, axis=-1, keepdims=True)
        var = jnp.mean((h - mu) ** 2, axis=-1, keepdims=True)
        return (h - mu) / jnp.sqrt(var + EPS) * gamma + beta

    h = x @ w1 + b1
    a1 = jnp.maximum(layernorm(h @ m1, g1, be1), 0.0)
    n2 = layernorm(a1 @ m2, g2, be2)
    ns = layernorm(h @ ms, gs, bes)
    blk = jnp.maximum(n2 + ns, 0.0)
    return blk @ wf + bf


# ---------------- main ----------------

if __name__ == "__main__":
    key = jax.random.PRNGKey(0)
    keys = jax.random.split(key, 12)

    # shapes fixed by blk_model.__init__:
    #   first_layer: Linear(18, 18); BasicBlock(in_planes=2, planes=4, stride=2) on 3x3;
    #   final_layer: Linear(16, 10); forward hard-codes batch N = 2.
    N = 2

    def uni(k, shape, fan_in):
        bound = 1.0 / np.sqrt(fan_in)
        return jax.random.uniform(k, shape, jnp.float32, -bound, bound)

    w_first = uni(keys[0], (18, 18), 18)          # torch weight (out, in)
    b_first = uni(keys[1], (1, 18), 18)
    w_conv1 = uni(keys[2], (4, 2, 3, 3), 2 * 9)   # conv1: 2->4, k3, s2, p1
    w_conv2 = uni(keys[3], (4, 4, 3, 3), 4 * 9)   # conv2: 4->4, k3, s1, p1
    w_convs = uni(keys[4], (4, 2, 1, 1), 2 * 1)   # shortcut: 2->4, k1, s2
    g1 = 1.0 + 0.1 * jax.random.normal(keys[5], (4, 2, 2), jnp.float32)
    be1 = 0.1 * jax.random.normal(keys[6], (4, 2, 2), jnp.float32)
    g2 = 1.0 + 0.1 * jax.random.normal(keys[7], (4, 2, 2), jnp.float32)
    be2 = 0.1 * jax.random.normal(keys[8], (4, 2, 2), jnp.float32)
    gs = 1.0 + 0.1 * jax.random.normal(keys[9], (4, 2, 2), jnp.float32)
    bes = 0.1 * jax.random.normal(keys[10], (4, 2, 2), jnp.float32)
    w_final = uni(keys[11], (10, 16), 16)         # torch weight (out, in)
    b_final = uni(jax.random.PRNGKey(1), (1, 10), 16)

    # lower convs to dense matrices (offline, input-independent)
    m1 = conv_to_matrix(w_conv1, (2, 3, 3), stride=2, pad=1)   # (18, 16)
    m2 = conv_to_matrix(w_conv2, (4, 2, 2), stride=1, pad=1)   # (16, 16)
    ms = conv_to_matrix(w_convs, (2, 3, 3), stride=2, pad=0)   # (18, 16)

    w1_t = jnp.asarray(np.asarray(w_first).T)                   # x @ w1_t == Linear
    wf_t = jnp.asarray(np.asarray(w_final).T)

    # single packed parameter slab (one DMA), with first_layer folded in
    packed = pack_params(w1_t, b_first, m1, m2, ms,
                         g1, be1, g2, be2, gs, bes, wf_t, b_final)

    # unfused params for the pure-JAX reference
    ref_params = (
        w1_t, b_first,
        jnp.asarray(m1), g1.reshape(1, 16), be1.reshape(1, 16),
        jnp.asarray(m2), g2.reshape(1, 16), be2.reshape(1, 16),
        jnp.asarray(ms), gs.reshape(1, 16), bes.reshape(1, 16),
        wf_t, b_final,
    )

    x = jax.random.normal(jax.random.PRNGKey(2), (N, 3 * 3 * 2), jnp.float32)

    out = blk_model_forward(x, packed)
    out = jax.block_until_ready(out)

    ref = reference_forward(x, ref_params)
    assert out.shape == (N, 10)
    np.testing.assert_allclose(np.asarray(out), np.asarray(ref), rtol=1e-4, atol=1e-4)

    print("KERNEL_OK")
</pallas_src>

<mosaic_0001>
module attributes {stable_mosaic.version = 11 : i64} {
  func.func @blk_model_kernel(%arg0: i32, %arg1: memref<8x18xf32, #tpu.memory_space<vmem>>, %arg2: memref<72x128xf32, #tpu.memory_space<vmem>>, %arg3: memref<8x10xf32, #tpu.memory_space<vmem>>) attributes {dimension_semantics = [#tpu.dimension_semantics<parallel>], iteration_bounds = array<i64: 1>, scalar_prefetch = 0 : i64, scratch_operands = 0 : i64, tpu.core_type = #tpu.core_type<tc>, window_params = [{transform_indices = @transform_0, window_bounds = array<i64: 8, 18>}, {pipeline_mode = #tpu.pipeline_mode<synchronous>, transform_indices = @transform_1, window_bounds = array<i64: 72, 128>}, {transform_indices = @transform_2, window_bounds = array<i64: 8, 10>}]} {
    %c0 = arith.constant 0 : index
    %c0_0 = arith.constant 0 : index
    %0 = vector.load %arg1[%c0, %c0_0] : memref<8x18xf32, #tpu.memory_space<vmem>>, vector<8x18xf32>
    %c0_1 = arith.constant 0 : index
    %c0_2 = arith.constant 0 : index
    %1 = vector.load %arg2[%c0_1, %c0_2] : memref<72x128xf32, #tpu.memory_space<vmem>>, vector<18x32xf32>
    %c24 = arith.constant 24 : index
    %c0_3 = arith.constant 0 : index
    %2 = vector.load %arg2[%c24, %c0_3] : memref<72x128xf32, #tpu.memory_space<vmem>>, vector<16x16xf32>
    %c40 = arith.constant 40 : index
    %c0_4 = arith.constant 0 : index
    %3 = vector.load %arg2[%c40, %c0_4] : memref<72x128xf32, #tpu.memory_space<vmem>>, vector<16x10xf32>
    %c56 = arith.constant 56 : index
    %c0_5 = arith.constant 0 : index
    %4 = vector.load %arg2[%c56, %c0_5] : memref<72x128xf32, #tpu.memory_space<vmem>>, vector<1x16xf32>
    %c57 = arith.constant 57 : index
    %c0_6 = arith.constant 0 : index
    %5 = vector.load %arg2[%c57, %c0_6] : memref<72x128xf32, #tpu.memory_space<vmem>>, vector<1x16xf32>
    %c58 = arith.constant 58 : index
    %c0_7 = arith.constant 0 : index
    %6 = vector.load %arg2[%c58, %c0_7] : memref<72x128xf32, #tpu.memory_space<vmem>>, vector<1x16xf32>
    %c59 = arith.constant 59 : index
    %c0_8 = arith.constant 0 : index
    %7 = vector.load %arg2[%c59, %c0_8] : memref<72x128xf32, #tpu.memory_space<vmem>>, vector<1x16xf32>
    %c60 = arith.constant 60 : index
    %c0_9 = arith.constant 0 : index
    %8 = vector.load %arg2[%c60, %c0_9] : memref<72x128xf32, #tpu.memory_space<vmem>>, vector<1x16xf32>
    %c61 = arith.constant 61 : index
    %c0_10 = arith.constant 0 : index
    %9 = vector.load %arg2[%c61, %c0_10] : memref<72x128xf32, #tpu.memory_space<vmem>>, vector<1x16xf32>
    %c62 = arith.constant 62 : index
    %c0_11 = arith.constant 0 : index
    %10 = vector.load %arg2[%c62, %c0_11] : memref<72x128xf32, #tpu.memory_space<vmem>>, vector<1x16xf32>
    %c63 = arith.constant 63 : index
    %c0_12 = arith.constant 0 : index
    %11 = vector.load %arg2[%c63, %c0_12] : memref<72x128xf32, #tpu.memory_space<vmem>>, vector<1x16xf32>
    %c64 = arith.constant 64 : index
    %c0_13 = arith.constant 0 : index
    %12 = vector.load %arg2[%c64, %c0_13] : memref<72x128xf32, #tpu.memory_space<vmem>>, vector<1x10xf32>
    %cst = arith.constant dense<0.000000e+00> : vector<8x32xf32>
    %13 = tpu.matmul %0, %1, %cst {dimension_numbers = #tpu.dot_dimension_numbers<[1], [0], [0], [1], [0, 0, 1, 1], [], []>} : vector<8x18xf32>, vector<18x32xf32>, vector<8x32xf32> -> vector<8x32xf32>
    %14 = vector.extract_strided_slice %13 {offsets = [0, 0], sizes = [8, 16], strides = [1, 1]} : vector<8x32xf32> to vector<8x16xf32>
    %15 = vector.broadcast %4 : vector<1x16xf32> to vector<8x16xf32>
    %16 = arith.addf %14, %15 : vector<8x16xf32>
    %17 = vector.extract_strided_slice %13 {offsets = [0, 16], sizes = [8, 16], strides = [1, 1]} : vector<8x32xf32> to vector<8x16xf32>
    %18 = vector.broadcast %5 : vector<1x16xf32> to vector<8x16xf32>
    %19 = arith.addf %17, %18 : vector<8x16xf32>
    %cst_14 = arith.constant dense<0.000000e+00> : vector<8xf32>
    %20 = vector.multi_reduction <add>, %16, %cst_14 [1] : vector<8x16xf32> to vector<8xf32>
    %21 = vector.shape_cast %20 : vector<8xf32> to vector<8x1xf32>
    %cst_15 = arith.constant 6.250000e-02 : f32
    %22 = vector.broadcast %cst_15 : f32 to vector<8x1xf32>
    %23 = arith.mulf %21, %22 : vector<8x1xf32>
    %24 = arith.mulf %16, %16 : vector<8x16xf32>
    %cst_16 = arith.constant dense<0.000000e+00> : vector<8xf32>
    %25 = vector.multi_reduction <add>, %24, %cst_16 [1] : vector<8x16xf32> to vector<8xf32>
    %26 = vector.shape_cast %25 : vector<8xf32> to vector<8x1xf32>
    %cst_17 = arith.constant 6.250000e-02 : f32
    %27 = vector.broadcast %cst_17 : f32 to vector<8x1xf32>
    %28 = arith.mulf %26, %27 : vector<8x1xf32>
    %29 = arith.mulf %23, %23 : vector<8x1xf32>
    %30 = arith.subf %28, %29 : vector<8x1xf32>
    %31 = vector.broadcast %23 : vector<8x1xf32> to vector<8x16xf32>
    %32 = arith.subf %16, %31 : vector<8x16xf32>
    %cst_18 = arith.constant 3.906250e-03 : f32
    %33 = vector.broadcast %cst_18 : f32 to vector<8x1xf32>
    %34 = arith.addf %30, %33 : vector<8x1xf32>
    %35 = math.rsqrt %34 : vector<8x1xf32>
    %36 = vector.broadcast %35 : vector<8x1xf32> to vector<8x16xf32>
    %37 = arith.mulf %32, %36 : vector<8x16xf32>
    %38 = vector.broadcast %6 : vector<1x16xf32> to vector<8x16xf32>
    %39 = arith.mulf %37, %38 : vector<8x16xf32>
    %40 = vector.broadcast %7 : vector<1x16xf32> to vector<8x16xf32>
    %41 = arith.addf %39, %40 : vector<8x16xf32>
    %cst_19 = arith.constant 0.000000e+00 : f32
    %42 = vector.broadcast %cst_19 : f32 to vector<8x16xf32>
    %43 = arith.maximumf %41, %42 : vector<8x16xf32>
    %cst_20 = arith.constant dense<0.000000e+00> : vector<8x16xf32>
    %44 = tpu.matmul %43, %2, %cst_20 {dimension_numbers = #tpu.dot_dimension_numbers<[1], [0], [0], [1], [0, 0, 1, 1], [], []>} : vector<8x16xf32>, vector<16x16xf32>, vector<8x16xf32> -> vector<8x16xf32>
    %cst_21 = arith.constant dense<0.000000e+00> : vector<8xf32>
    %45 = vector.multi_reduction <add>, %44, %cst_21 [1] : vector<8x16xf32> to vector<8xf32>
    %46 = vector.shape_cast %45 : vector<8xf32> to vector<8x1xf32>
    %cst_22 = arith.constant 6.250000e-02 : f32
    %47 = vector.broadcast %cst_22 : f32 to vector<8x1xf32>
    %48 = arith.mulf %46, %47 : vector<8x1xf32>
    %49 = arith.mulf %44, %44 : vector<8x16xf32>
    %cst_23 = arith.constant dense<0.000000e+00> : vector<8xf32>
    %50 = vector.multi_reduction <add>, %49, %cst_23 [1] : vector<8x16xf32> to vector<8xf32>
    %51 = vector.shape_cast %50 : vector<8xf32> to vector<8x1xf32>
    %cst_24 = arith.constant 6.250000e-02 : f32
    %52 = vector.broadcast %cst_24 : f32 to vector<8x1xf32>
    %53 = arith.mulf %51, %52 : vector<8x1xf32>
    %54 = arith.mulf %48, %48 : vector<8x1xf32>
    %55 = arith.subf %53, %54 : vector<8x1xf32>
    %56 = vector.broadcast %48 : vector<8x1xf32> to vector<8x16xf32>
    %57 = arith.subf %44, %56 : vector<8x16xf32>
    %cst_25 = arith.constant 3.906250e-03 : f32
    %58 = vector.broadcast %cst_25 : f32 to vector<8x1xf32>
    %59 = arith.addf %55, %58 : vector<8x1xf32>
    %60 = math.rsqrt %59 : vector<8x1xf32>
    %61 = vector.broadcast %60 : vector<8x1xf32> to vector<8x16xf32>
    %62 = arith.mulf %57, %61 : vector<8x16xf32>
    %63 = vector.broadcast %8 : vector<1x16xf32> to vector<8x16xf32>
    %64 = arith.mulf %62, %63 : vector<8x16xf32>
    %65 = vector.broadcast %9 : vector<1x16xf32> to vector<8x16xf32>
    %66 = arith.addf %64, %65 : vector<8x16xf32>
    %cst_26 = arith.constant dense<0.000000e+00> : vector<8xf32>
    %67 = vector.multi_reduction <add>, %19, %cst_26 [1] : vector<8x16xf32> to vector<8xf32>
    %68 = vector.shape_cast %67 : vector<8xf32> to vector<8x1xf32>
    %cst_27 = arith.constant 6.250000e-02 : f32
    %69 = vector.broadcast %cst_27 : f32 to vector<8x1xf32>
    %70 = arith.mulf %68, %69 : vector<8x1xf32>
    %71 = arith.mulf %19, %19 : vector<8x16xf32>
    %cst_28 = arith.constant dense<0.000000e+00> : vector<8xf32>
    %72 = vector.multi_reduction <add>, %71, %cst_28 [1] : vector<8x16xf32> to vector<8xf32>
    %73 = vector.shape_cast %72 : vector<8xf32> to vector<8x1xf32>
    %cst_29 = arith.constant 6.250000e-02 : f32
    %74 = vector.broadcast %cst_29 : f32 to vector<8x1xf32>
    %75 = arith.mulf %73, %74 : vector<8x1xf32>
    %76 = arith.mulf %70, %70 : vector<8x1xf32>
    %77 = arith.subf %75, %76 : vector<8x1xf32>
    %78 = vector.broadcast %70 : vector<8x1xf32> to vector<8x16xf32>
    %79 = arith.subf %19, %78 : vector<8x16xf32>
    %cst_30 = arith.constant 3.906250e-03 : f32
    %80 = vector.broadcast %cst_30 : f32 to vector<8x1xf32>
    %81 = arith.addf %77, %80 : vector<8x1xf32>
    %82 = math.rsqrt %81 : vector<8x1xf32>
    %83 = vector.broadcast %82 : vector<8x1xf32> to vector<8x16xf32>
    %84 = arith.mulf %79, %83 : vector<8x16xf32>
    %85 = vector.broadcast %10 : vector<1x16xf32> to vector<8x16xf32>
    %86 = arith.mulf %84, %85 : vector<8x16xf32>
    %87 = vector.broadcast %11 : vector<1x16xf32> to vector<8x16xf32>
    %88 = arith.addf %86, %87 : vector<8x16xf32>
    %89 = arith.addf %66, %88 : vector<8x16xf32>
    %cst_31 = arith.constant 0.000000e+00 : f32
    %90 = vector.broadcast %cst_31 : f32 to vector<8x16xf32>
    %91 = arith.maximumf %89, %90 : vector<8x16xf32>
    %cst_32 = arith.constant dense<0.000000e+00> : vector<8x10xf32>
    %92 = tpu.matmul %91, %3, %cst_32 {dimension_numbers = #tpu.dot_dimension_numbers<[1], [0], [0], [1], [0, 0, 1, 1], [], []>} : vector<8x16xf32>, vector<16x10xf32>, vector<8x10xf32> -> vector<8x10xf32>
    %93 = vector.broadcast %12 : vector<1x10xf32> to vector<8x10xf32>
    %94 = arith.addf %92, %93 : vector<8x10xf32>
    %c0_33 = arith.constant 0 : index
    %c0_34 = arith.constant 0 : index
    %95 = vector.load %arg3[%c0_33, %c0_34] : memref<8x10xf32, #tpu.memory_space<vmem>>, vector<8x10xf32>
    tpu.vector_store %arg3[%c0_33, %c0_34], %94 {strides = array<i32>} : memref<8x10xf32, #tpu.memory_space<vmem>>, vector<8x10xf32>,
    return
  }
  func.func @transform_0(%arg0: i32) -> (i32, i32) {
    %c0_i32 = arith.constant 0 : i32
    %c0_i32_0 = arith.constant 0 : i32
    return %arg0, %c0_i32 : i32, i32
  }
  func.func @transform_1(%arg0: i32) -> (i32, i32) {
    %c0_i32 = arith.constant 0 : i32
    %c0_i32_0 = arith.constant 0 : i32
    %c0_i32_1 = arith.constant 0 : i32
    return %c0_i32, %c0_i32_0 : i32, i32
  }
  func.func @transform_2(%arg0: i32) -> (i32, i32) {
    %c0_i32 = arith.constant 0 : i32
    %c0_i32_0 = arith.constant 0 : i32
    return %arg0, %c0_i32 : i32, i32
  }
}

</mosaic_0001>

<llo_original>
// kernel: tpu_custom_call.1
$region0: #{tpu_custom_call.1}
  #allocation0 [shape = 'u32[]', space=smem, size = 0x4, offset = 0x4, fixed_abs, tag = 'smem constant byte address 0x4 - core index']
  #allocation1 [shape = 'u32[144,128]{1,0:T(1,128)}', space=vmem, size = 0x12000, scoped, tag = 'internal scratch']
  %s0 = inlined_call_operand.hbm [shape: f32[8,18], index: 0, kind: input, shape index: {}]
  %s1 = inlined_call_operand.hbm [shape: f32[72,128], index: 1, kind: input, shape index: {}]
  %s2 = inlined_call_operand.hbm [shape: f32[8,10], index: 2, kind: output, shape index: {}]
  %s3 = sld [smem:[#allocation0]]
  $region26: #{tpu_custom_call.1} parent=0
    _
  %s5 = ssub.s32 1, %s3
  %s6 = scalar_select 0, %s5, %s3
  $region1: #{tpu_custom_call.1} parent=0
    #allocation2 [shape = 'u8[4096]{0}', space=vmem, size = 0x1000, scoped, tag = 'input window, operand 0, single buffered']
    #allocation3 [shape = 's32[1]{0}', space=sflag, size = 0x4, scoped, tag = 'scoped memory for tpu_custom_call.1']
    #allocation4 [shape = 's32[1]{0}', space=sflag, size = 0x4, scoped, tag = 'scoped memory for tpu_custom_call.1']
    #allocation5 [shape = 'u8[36864]{0}', space=vmem, size = 0x9000, scoped, tag = 'input window, operand 1, single buffered']
    #allocation6 [shape = 's32[1]{0}', space=sflag, size = 0x4, scoped, tag = 'scoped memory for tpu_custom_call.1']
    #allocation7 [shape = 'u8[4096]{0}', space=vmem, size = 0x1000, scoped, tag = 'output window, operand 0, single buffered']
    %7 = vsyncpa [#allocation3], 0
    %8 = vsyncpa [#allocation6], 0
    %9 = vsyncpa [#allocation4], 0
    // Predicated region
    $region2: #{tpu_custom_call.1} parent=1 // pred_check
      _
    $region3: #{tpu_custom_call.1} parent=1 // pred_check_branch
      %11 = sbr.rel (0) target = $region5
    $region4: #{tpu_custom_call.1} parent=1 // pred_region
      %s13 = ssub.s32 128, 128
      %14 = vsyncadd [#allocation3], %s13
      %s16 = sshll.u32 [#allocation2], 4
      %s17 = int_to_ptr.vmem [resolvable:$true] %s16
      %19 = dma.hbm_to_vmem [thread:$0]  %s0, 128, %s17, [#allocation3]
    $region5: #{tpu_custom_call.1} parent=1 // pred_fallthru
      _
    // Predicated region
    $region6: #{tpu_custom_call.1} parent=1 // pred_check
      _
    $region7: #{tpu_custom_call.1} parent=1 // pred_check_branch
      %21 = sbr.rel (0) target = $region9
    $region8: #{tpu_custom_call.1} parent=1 // pred_region
      %s23 = ssub.s32 1152, 1152
      %24 = vsyncadd [#allocation6], %s23
      %s25 = sshll.u32 [#allocation5], 4
      %s26 = int_to_ptr.vmem [resolvable:$true] %s25
      %31 = dma.hbm_to_vmem [thread:$0]  %s1, 1152, %s26, [#allocation6], 128, 128, 8
    $region9: #{tpu_custom_call.1} parent=1 // pred_fallthru
      _
    // Predicated region
    $region10: #{tpu_custom_call.1} parent=1 // pred_check
      _
    $region11: #{tpu_custom_call.1} parent=1 // pred_check_branch
      %33 = sbr.rel (0) target = $region13
    $region12: #{tpu_custom_call.1} parent=1 // pred_region
      %34 = dma.done [#allocation3], 128
    $region13: #{tpu_custom_call.1} parent=1 // pred_fallthru
      _
    // Predicated region
    $region14: #{tpu_custom_call.1} parent=1 // pred_check
      _
    $region15: #{tpu_custom_call.1} parent=1 // pred_check_branch
      %36 = sbr.rel (0) target = $region17
    $region16: #{tpu_custom_call.1} parent=1 // pred_region
      %37 = dma.done [#allocation6], 1152
    $region17: #{tpu_custom_call.1} parent=1 // pred_fallthru
      _
    %v38 = vld [vmem:[#allocation2] sm:$0xff]
    %v39 = vld [vmem:[#allocation5] sm:$0xff]
    %v40 = vld [vmem:[#allocation5 + $0x8] sm:$0xff]
    %v41 = vld [vmem:[#allocation5 + $0x10] sm:$0x3]
    %v42 = vld [vmem:[#allocation5 + $0x18] sm:$0xff]
    %v43 = vld [vmem:[#allocation5 + $0x20] sm:$0xff]
    %v44 = vld [vmem:[#allocation5 + $0x28] sm:$0xff]
    %v45 = vld [vmem:[#allocation5 + $0x30] sm:$0xff]
    %v46 = vld [vmem:[#allocation5 + $0x38] sm:$0x1]
    %v47 = vld [vmem:[#allocation5 + $0x39] sm:$0x1]
    %v48 = vld [vmem:[#allocation5 + $0x3a] sm:$0x1]
    %v49 = vld [vmem:[#allocation5 + $0x3b] sm:$0x1]
    %v50 = vld [vmem:[#allocation5 + $0x3c] sm:$0x1]
    %v51 = vld [vmem:[#allocation5 + $0x3d] sm:$0x1]
    %v52 = vld [vmem:[#allocation5 + $0x3e] sm:$0x1]
    %v53 = vld [vmem:[#allocation5 + $0x3f] sm:$0x1]
    %v54 = vld [vmem:[#allocation5 + $0x40] sm:$0x1]
    %vm55 = vcmask 146432
    %v57 = vsel %vm55, %v38, 0
    %vm59 = vcmask 1041408
    %v61 = vsel %vm59, %v41, 0
    %63 = vmatprep.subr.mxu0 0.0
    %64 = vmatpush1.msra.mxu0 %v39
    %65 = vmatprep.subr.mxu0 0.0
    %66 = vmatpush1.msra.mxu0 %v40
    %67 = vmatprep.subr.mxu0 0.0
    %68 = vmatpush1.msra.mxu0 %v61
    %69 = vmatprep.subr.mxu0 0.0
    %70 = vmatpush1.msra.mxu0 0.0
    %71 = vmatprep.subr.mxu0 0.0
    %72 = vmatpush1.msra.mxu0 0.0
    %73 = vmatprep.subr.mxu0 0.0
    %74 = vmatpush1.msra.mxu0 0.0
    %75 = vmatprep.subr.mxu0 0.0
    %76 = vmatpush1.msra.mxu0 0.0
    %77 = vmatprep.subr.mxu0 0.0
    %78 = vmatpush1.msra.mxu0 0.0
    %79 = vmatprep.subr.mxu0 0.0
    %80 = vmatpush1.msra.mxu0 0.0
    %81 = vmatprep.subr.mxu0 0.0
    %82 = vmatpush1.msra.mxu0 0.0
    %83 = vmatprep.subr.mxu0 0.0
    %84 = vmatpush1.msra.mxu0 0.0
    %85 = vmatprep.subr.mxu0 0.0
    %86 = vmatpush1.msra.mxu0 0.0
    %87 = vmatprep.subr.mxu0 0.0
    %88 = vmatpush1.msra.mxu0 0.0
    %89 = vmatprep.subr.mxu0 0.0
    %90 = vmatpush1.msra.mxu0 0.0
    %91 = vmatprep.subr.mxu0 0.0
    %92 = vmatpush1.msra.mxu0 0.0
    %93 = vmatprep.subr.mxu0 0.0
    %94 = vmatpush1.msra.mxu0 0.0
    %95 = vmatprep.subr.mxu0 0.0
    %96 = vmatpush1.msra.mxu0 0.0
    %97 = vmatprep.subr.mxu0 0.0
    %98 = vmatpush1.msra.mxu0 0.0
    %99 = vmatprep.subr.mxu0 0.0
    %100 = vmatpush1.msra.mxu0 0.0
    %101 = vmatprep.subr.mxu0 0.0
    %102 = vmatpush1.msra.mxu0 0.0
    %103 = vmatprep.subr.mxu0 0.0
    %104 = vmatpush1.msra.mxu0 0.0
    %105 = vmatprep.subr.mxu0 0.0
    %106 = vmatpush1.msra.mxu0 0.0
    %107 = vmatprep.subr.mxu0 0.0
    %108 = vmatpush1.msra.mxu0 0.0
    %109 = vmatprep.subr.mxu0 0.0
    %110 = vmatpush1.msra.mxu0 0.0
    %111 = vmatprep.subr.mxu0 0.0
    %112 = vmatpush1.msra.mxu0 0.0
    %113 = vmatprep.subr.mxu0 0.0
    %114 = vmatpush1.msra.mxu0 0.0
    %115 = vmatprep.subr.mxu0 0.0
    %116 = vmatpush1.msra.mxu0 0.0
    %117 = vmatprep.subr.mxu0 0.0
    %118 = vmatpush1.msra.mxu0 0.0
    %119 = vmatprep.subr.mxu0 0.0
    %120 = vmatpush1.msra.mxu0 0.0
    %121 = vmatprep.subr.mxu0 0.0
    %122 = vmatpush1.msra.mxu0 0.0
    %123 = vmatprep.subr.mxu0 0.0
    %124 = vmatpush1.msra.mxu0 0.0
    %125 = vmatprep.subr.mxu0 0.0
    %126 = vmatpush1.msra.mxu0 0.0
    %127 = vmatprep.mubr.f32.mxu0 0.0
    %128 = vmatmul.mubr.f32.gmra.mrb[0].mxu0 %v57
    %v129 = vpop.f32.mrb[0].mxu0
    %v130 = vadd.f32 0.0, %v129
    %v131 = vpop.f32.mrb[0].mxu0
    %132 = vdwg.mxu0
    %v133 = vlaneseq
    %v134 = vshrl.u32 %v133, 7
    %v135 = vsub.s32 0, %v134
    %v136 = vrot.slane %v46, %v135
    %v137 = vadd.f32 %v130, %v136
    %v138 = vlaneseq
    %v139 = vshrl.u32 %v138, 7
    %v140 = vsub.s32 0, %v139
    %v141 = vrot.slane %v47, %v140
    %143 = vrot.lane.b32.xlu0 %v141, 16
    %v144 = vpop.permute.xlu0 %143
    %v146 = vadd.f32 %v130, %v144
    %vm147 = vcmask 130048
    %v148 = vsel %vm147, %v137, 0.0
    %149 = vadd.xlane.f32.xlu0 %v148
    %v150 = vpop.xlane.xlu0 %149
    %v151 = vmul.f32 %v150, 0.0625
    %v152 = vmul.f32 %v137, %v137
    %v153 = vsel %vm147, %v152, 0.0
    %154 = vadd.xlane.f32.xlu0 %v153
    %v155 = vpop.xlane.xlu0 %154
    %v156 = vmul.f32 %v155, 0.0625
    %v157 = vmul.f32 %v151, %v151
    %v158 = vsub.f32 %v156, %v157
    %v159 = vsub.f32 %v137, %v151
    %v160 = vadd.f32 %v158, 0.00390625
    %v161 = vrsqrt.pop %v160
    %v162 = vmul.f32 %v159, %v161
    %v163 = vlaneseq
    %v164 = vshrl.u32 %v163, 7
    %v165 = vsub.s32 0, %v164
    %v166 = vrot.slane %v48, %v165
    %v167 = vmul.f32 %v162, %v166
    %v168 = vlaneseq
    %v169 = vshrl.u32 %v168, 7
    %v170 = vsub.s32 0, %v169
    %v171 = vrot.slane %v49, %v170
    %v172 = vadd.f32 %v167, %v171
    %v173 = vmax.f32 %v172, 0.0
    %v175 = vsel %vm147, %v173, 0
    %177 = vmatprep.subr.mxu0 0.0
    %178 = vmatpush1.msra.mxu0 %v42
    %179 = vmatprep.subr.mxu0 0.0
    %180 = vmatpush1.msra.mxu0 %v43
    %181 = vmatprep.subr.mxu0 0.0
    %182 = vmatpush1.msra.mxu0 0.0
    %183 = vmatprep.subr.mxu0 0.0
    %184 = vmatpush1.msra.mxu0 0.0
    %185 = vmatprep.subr.mxu0 0.0
    %186 = vmatpush1.msra.mxu0 0.0
    %187 = vmatprep.subr.mxu0 0.0
    %188 = vmatpush1.msra.mxu0 0.0
    %189 = vmatprep.subr.mxu0 0.0
    %190 = vmatpush1.msra.mxu0 0.0
    %191 = vmatprep.subr.mxu0 0.0
    %192 = vmatpush1.msra.mxu0 0.0
    %193 = vmatprep.subr.mxu0 0.0
    %194 = vmatpush1.msra.mxu0 0.0
    %195 = vmatprep.subr.mxu0 0.0
    %196 = vmatpush1.msra.mxu0 0.0
    %197 = vmatprep.subr.mxu0 0.0
    %198 = vmatpush1.msra.mxu0 0.0
    %199 = vmatprep.subr.mxu0 0.0
    %200 = vmatpush1.msra.mxu0 0.0
    %201 = vmatprep.subr.mxu0 0.0
    %202 = vmatpush1.msra.mxu0 0.0
    %203 = vmatprep.subr.mxu0 0.0
    %204 = vmatpush1.msra.mxu0 0.0
    %205 = vmatprep.subr.mxu0 0.0
    %206 = vmatpush1.msra.mxu0 0.0
    %207 = vmatprep.subr.mxu0 0.0
    %208 = vmatpush1.msra.mxu0 0.0
    %209 = vmatprep.subr.mxu0 0.0
    %210 = vmatpush1.msra.mxu0 0.0
    %211 = vmatprep.subr.mxu0 0.0
    %212 = vmatpush1.msra.mxu0 0.0
    %213 = vmatprep.subr.mxu0 0.0
    %214 = vmatpush1.msra.mxu0 0.0
    %215 = vmatprep.subr.mxu0 0.0
    %216 = vmatpush1.msra.mxu0 0.0
    %217 = vmatprep.subr.mxu0 0.0
    %218 = vmatpush1.msra.mxu0 0.0
    %219 = vmatprep.subr.mxu0 0.0
    %220 = vmatpush1.msra.mxu0 0.0
    %221 = vmatprep.subr.mxu0 0.0
    %222 = vmatpush1.msra.mxu0 0.0
    %223 = vmatprep.subr.mxu0 0.0
    %224 = vmatpush1.msra.mxu0 0.0
    %225 = vmatprep.subr.mxu0 0.0
    %226 = vmatpush1.msra.mxu0 0.0
    %227 = vmatprep.subr.mxu0 0.0
    %228 = vmatpush1.msra.mxu0 0.0
    %229 = vmatprep.subr.mxu0 0.0
    %230 = vmatpush1.msra.mxu0 0.0
    %231 = vmatprep.subr.mxu0 0.0
    %232 = vmatpush1.msra.mxu0 0.0
    %233 = vmatprep.subr.mxu0 0.0
    %234 = vmatpush1.msra.mxu0 0.0
    %235 = vmatprep.subr.mxu0 0.0
    %236 = vmatpush1.msra.mxu0 0.0
    %237 = vmatprep.subr.mxu0 0.0
    %238 = vmatpush1.msra.mxu0 0.0
    %239 = vmatprep.subr.mxu0 0.0
    %240 = vmatpush1.msra.mxu0 0.0
    %241 = vmatprep.mubr.f32.mxu0 0.0
    %242 = vmatmul.mubr.f32.gmra.mrb[0].mxu0 %v175
    %v243 = vpop.f32.mrb[0].mxu0
    %v244 = vadd.f32 0.0, %v243
    %v245 = vpop.f32.mrb[0].mxu0
    %246 = vdwg.mxu0
    %v247 = vsel %vm147, %v244, 0.0
    %248 = vadd.xlane.f32.xlu0 %v247
    %v249 = vpop.xlane.xlu0 %248
    %v250 = vmul.f32 %v249, 0.0625
    %v251 = vmul.f32 %v244, %v244
    %v252 = vsel %vm147, %v251, 0.0
    %253 = vadd.xlane.f32.xlu0 %v252
    %v254 = vpop.xlane.xlu0 %253
    %v255 = vmul.f32 %v254, 0.0625
    %v256 = vmul.f32 %v250, %v250
    %v257 = vsub.f32 %v255, %v256
    %v258 = vsub.f32 %v244, %v250
    %v259 = vadd.f32 %v257, 0.00390625
    %v260 = vrsqrt.pop %v259
    %v261 = vmul.f32 %v258, %v260
    %v262 = vlaneseq
    %v263 = vshrl.u32 %v262, 7
    %v264 = vsub.s32 0, %v263
    %v265 = vrot.slane %v50, %v264
    %v266 = vmul.f32 %v261, %v265
    %v267 = vlaneseq
    %v268 = vshrl.u32 %v267, 7
    %v269 = vsub.s32 0, %v268
    %v270 = vrot.slane %v51, %v269
    %v271 = vadd.f32 %v266, %v270
    %273 = vrot.lane.b32.xlu0 %v146, 112
    %v274 = vpop.permute.xlu0 %273
    %v276 = vsel %vm147, %v274, 0.0
    %277 = vadd.xlane.f32.xlu0 %v276
    %v278 = vpop.xlane.xlu0 %277
    %v279 = vmul.f32 %v278, 0.0625
    %v280 = vmul.f32 %v146, %v146
    %282 = vrot.lane.b32.xlu0 %v280, 112
    %v283 = vpop.permute.xlu0 %282
    %v285 = vsel %vm147, %v283, 0.0
    %286 = vadd.xlane.f32.xlu0 %v285
    %v287 = vpop.xlane.xlu0 %286
    %v288 = vmul.f32 %v287, 0.0625
    %v289 = vmul.f32 %v279, %v279
    %v290 = vsub.f32 %v288, %v289
    %v291 = vsub.f32 %v146, %v279
    %v292 = vadd.f32 %v290, 0.00390625
    %v293 = vrsqrt.pop %v292
    %v294 = vmul.f32 %v291, %v293
    %v295 = vlaneseq
    %v296 = vshrl.u32 %v295, 7
    %v297 = vsub.s32 0, %v296
    %v298 = vrot.slane %v52, %v297
    %300 = vrot.lane.b32.xlu0 %v298, 16
    %v301 = vpop.permute.xlu0 %300
    %v303 = vmul.f32 %v294, %v301
    %v304 = vlaneseq
    %v305 = vshrl.u32 %v304, 7
    %v306 = vsub.s32 0, %v305
    %v307 = vrot.slane %v53, %v306
    %309 = vrot.lane.b32.xlu0 %v307, 16
    %v310 = vpop.permute.xlu0 %309
    %v312 = vadd.f32 %v303, %v310
    %314 = vrot.lane.b32.xlu0 %v312, 112
    %v315 = vpop.permute.xlu0 %314
    %v317 = vadd.f32 %v271, %v315
    %v318 = vmax.f32 %v317, 0.0
    %v319 = vlaneseq
    %v320 = vshrl.u32 %v319, 7
    %v321 = vsub.s32 0, %v320
    %v322 = vrot.slane %v54, %v321
    %v324 = vsel %vm147, %v318, 0
    %326 = vmatprep.subr.mxu0 0.0
    %327 = vmatpush1.msra.mxu0 %v44
    %328 = vmatprep.subr.mxu0 0.0
    %329 = vmatpush1.msra.mxu0 %v45
    %330 = vmatprep.subr.mxu0 0.0
    %331 = vmatpush1.msra.mxu0 0.0
    %332 = vmatprep.subr.mxu0 0.0
    %333 = vmatpush1.msra.mxu0 0.0
    %334 = vmatprep.subr.mxu0 0.0
    %335 = vmatpush1.msra.mxu0 0.0
    %336 = vmatprep.subr.mxu0 0.0
    %337 = vmatpush1.msra.mxu0 0.0
    %338 = vmatprep.subr.mxu0 0.0
    %339 = vmatpush1.msra.mxu0 0.0
    %340 = vmatprep.subr.mxu0 0.0
    %341 = vmatpush1.msra.mxu0 0.0
    %342 = vmatprep.subr.mxu0 0.0
    %343 = vmatpush1.msra.mxu0 0.0
    %344 = vmatprep.subr.mxu0 0.0
    %345 = vmatpush1.msra.mxu0 0.0
    %346 = vmatprep.subr.mxu0 0.0
    %347 = vmatpush1.msra.mxu0 0.0
    %348 = vmatprep.subr.mxu0 0.0
    %349 = vmatpush1.msra.mxu0 0.0
    %350 = vmatprep.subr.mxu0 0.0
    %351 = vmatpush1.msra.mxu0 0.0
    %352 = vmatprep.subr.mxu0 0.0
    %353 = vmatpush1.msra.mxu0 0.0
    %354 = vmatprep.subr.mxu0 0.0
    %355 = vmatpush1.msra.mxu0 0.0
    %356 = vmatprep.subr.mxu0 0.0
    %357 = vmatpush1.msra.mxu0 0.0
    %358 = vmatprep.subr.mxu0 0.0
    %359 = vmatpush1.msra.mxu0 0.0
    %360 = vmatprep.subr.mxu0 0.0
    %361 = vmatpush1.msra.mxu0 0.0
    %362 = vmatprep.subr.mxu0 0.0
    %363 = vmatpush1.msra.mxu0 0.0
    %364 = vmatprep.subr.mxu0 0.0
    %365 = vmatpush1.msra.mxu0 0.0
    %366 = vmatprep.subr.mxu0 0.0
    %367 = vmatpush1.msra.mxu0 0.0
    %368 = vmatprep.subr.mxu0 0.0
    %369 = vmatpush1.msra.mxu0 0.0
    %370 = vmatprep.subr.mxu0 0.0
    %371 = vmatpush1.msra.mxu0 0.0
    %372 = vmatprep.subr.mxu0 0.0
    %373 = vmatpush1.msra.mxu0 0.0
    %374 = vmatprep.subr.mxu0 0.0
    %375 = vmatpush1.msra.mxu0 0.0
    %376 = vmatprep.subr.mxu0 0.0
    %377 = vmatpush1.msra.mxu0 0.0
    %378 = vmatprep.subr.mxu0 0.0
    %379 = vmatpush1.msra.mxu0 0.0
    %380 = vmatprep.subr.mxu0 0.0
    %381 = vmatpush1.msra.mxu0 0.0
    %382 = vmatprep.subr.mxu0 0.0
    %383 = vmatpush1.msra.mxu0 0.0
    %384 = vmatprep.subr.mxu0 0.0
    %385 = vmatpush1.msra.mxu0 0.0
    %386 = vmatprep.subr.mxu0 0.0
    %387 = vmatpush1.msra.mxu0 0.0
    %388 = vmatprep.subr.mxu0 0.0
    %389 = vmatpush1.msra.mxu0 0.0
    %390 = vmatprep.mubr.f32.mxu0 0.0
    %391 = vmatmul.mubr.f32.gmra.mrb[0].mxu0 %v324
    %v392 = vpop.f32.mrb[0].mxu0
    %v393 = vadd.f32 %v322, %v392
    %v394 = vpop.f32.mrb[0].mxu0
    %395 = vdwg.mxu0
    %vm396 = vcmask 80896
    %397 = vst.msk [vmem:[#allocation7] sm:$0xff] %vm396, %v393
    // Predicated region
    $region18: #{tpu_custom_call.1} parent=1 // pred_check
      _
    $region19: #{tpu_custom_call.1} parent=1 // pred_check_branch
      %399 = sbr.rel (0) target = $region21
    $region20: #{tpu_custom_call.1} parent=1 // pred_region
      %s401 = ssub.s32 128, 128
      %402 = vsyncadd [#allocation4], %s401
      %s404 = sshll.u32 [#allocation7], 4
      %s405 = int_to_ptr.vmem [resolvable:$true] %s404
      %407 = dma.vmem_to_hbm [thread:$0]  %s405, 128, %s2, [#allocation4]
    $region21: #{tpu_custom_call.1} parent=1 // pred_fallthru
      _
    // Predicated region
    $region22: #{tpu_custom_call.1} parent=1 // pred_check
      _
    $region23: #{tpu_custom_call.1} parent=1 // pred_check_branch
      %409 = sbr.rel (0) target = $region25
    $region24: #{tpu_custom_call.1} parent=1 // pred_region
      %410 = dma.done [#allocation4], 128
    $region25: #{tpu_custom_call.1} parent=1 // pred_fallthru
      _
    %411 = vsyncpa [#allocation3], 1
    %412 = vsyncpa [#allocation6], 1
    %413 = vsyncpa [#allocation4], 1

</llo_original>
